<compile_context>
chip_gen: v7x
topology: tpu7x:2x2x1
jax: 0.10.0
libtpu: 0.0.40
codegen_flags: <defaults>
</compile_context>

<pallas_src>
import jax
import jax.numpy as jnp
from jax.experimental import pallas as pl
from jax.experimental.pallas import tpu as pltpu

_IN_TILE_BUDGET = 8 << 20  # target bytes per (single) input buffer in VMEM


def _adaptive_bin_edges(size: int, level: int):
    """PyTorch adaptive pooling bin edges: [floor(j*size/L), ceil((j+1)*size/L))."""
    edges = []
    for j in range(level):
        start = (j * size) // level
        end = -((-(j + 1) * size) // level)  # ceil division
        edges.append((start, end))
    return edges


def _choose_channel_tile(c: int, per_channel_bytes: int,
                         budget_bytes: int = _IN_TILE_BUDGET) -> int:
    """Pick a channel tile: whole C if it fits, else a multiple of 128 lanes."""
    if c * per_channel_bytes <= budget_bytes:
        return c
    tc = (budget_bytes // per_channel_bytes) // 128 * 128
    if tc == 0:
        # One channel slab alone is bigger than the budget: fall back to the
        # smallest lane-dense tile and rely on the raised vmem limit.
        tc = 128
    return int(min(tc, c))


def _make_kernel(levels, bin_dim, reduce_axis, neg_value):
    """Kernel factory.

    reduce_axis: axis of the (TC, H, W) block that is fully max-reduced
                 (1 == H for horizontal pooling, 2 == W for vertical pooling).
    bin_dim:     size of the remaining (binned) spatial axis.
    """
    levels = tuple(levels)
    max_level = max(levels)
    fine_edges = _adaptive_bin_edges(bin_dim, max_level)
    fallback_edges = {
        lv: _adaptive_bin_edges(bin_dim, lv)
        for lv in set(levels)
        if lv != max_level and max_level % lv != 0
    }

    def kernel(x_ref, o_ref):
        x = x_ref[...]                        # (TC, H, W)
        xm = jnp.max(x, axis=reduce_axis)     # (TC, bin_dim)
        fill = jnp.array(neg_value, dtype=xm.dtype)
        # Lane masks instead of non-lane-aligned slices: data stays in place,
        # boundary handling becomes VPU selects (free under the DMA shadow).
        idx = jax.lax.broadcasted_iota(jnp.int32, xm.shape, 1)

        def masked_cols(edges):
            cols = []
            for (s, e) in edges:
                m = (idx >= s) & (idx < e)
                cols.append(jnp.max(jnp.where(m, xm, fill), axis=-1, keepdims=True))
            return cols                        # list of (TC, 1)

        # Compute only the finest level's bins with reductions.
        fine_cols = masked_cols(fine_edges)

        out_cols = []
        for lv in levels:
            if lv == max_level:
                out_cols.extend(fine_cols)
            elif max_level % lv == 0:
                # Coarse bins are exact unions of consecutive fine bins
                # (PyTorch adaptive bins nest when lv | max_level): derive
                # them with cheap pairwise maxes instead of re-reducing.
                g = max_level // lv
                for j in range(lv):
                    col = fine_cols[j * g]
                    for t in range(1, g):
                        col = jnp.maximum(col, fine_cols[j * g + t])
                    out_cols.append(col)
            else:
                out_cols.extend(masked_cols(fallback_edges[lv]))

        res = jnp.concatenate(out_cols, axis=-1)            # (TC, total)
        # Single lane-dense store: channels on the lane axis of the out block.
        o_ref[...] = jnp.transpose(res, (1, 0)).astype(o_ref.dtype)  # (total, TC)

    return kernel


def temporal_pyramid_maxpool_2d(x, levels, vertical: bool = False,
                                channel_tile: int = None):
    """x: (N, C, H, W) -> (N, C * sum(levels)), matching the PyTorch module."""
    levels = tuple(int(l) for l in levels)
    n, c, h, w = x.shape
    total = sum(levels)
    itemsize = jnp.dtype(x.dtype).itemsize

    if vertical:
        # output size (level, 1): pool over all W, bins over H.
        reduce_axis, bin_dim = 2, h
    else:
        # output size (1, level): pool over all H, bins over W.
        reduce_axis, bin_dim = 1, w

    if jnp.issubdtype(x.dtype, jnp.floating):
        neg_value = float("-inf")
    else:
        neg_value = int(jnp.iinfo(x.dtype).min)

    per_channel_bytes = h * w * itemsize
    if channel_tile is not None:
        tc = int(channel_tile)
        if tc != c and tc % 128 != 0:
            raise ValueError("channel_tile must equal C or be a multiple of 128")
        tc = min(tc, c)
    else:
        tc = _choose_channel_tile(c, per_channel_bytes)
    num_c_tiles = pl.cdiv(c, tc)

    kernel = _make_kernel(levels, bin_dim, reduce_axis, neg_value)

    # Explicit VMEM budget: double-buffered input + output blocks + headroom
    # for in-kernel temporaries; capped below v7x's 64 MiB physical VMEM.
    in_buf = tc * h * w * itemsize
    out_buf = total * tc * itemsize
    needed = 4 * in_buf + 4 * out_buf + (4 << 20)
    vmem_limit = int(min(max(needed, 32 << 20), 64 << 20))

    out = pl.pallas_call(
        kernel,
        out_shape=jax.ShapeDtypeStruct((n, total, c), x.dtype),
        grid_spec=pltpu.PrefetchScalarGridSpec(
            num_scalar_prefetch=0,
            grid=(n, num_c_tiles),
            in_specs=[
                pl.BlockSpec((pl.Squeezed(), tc, h, w), lambda i, j: (i, j, 0, 0)),
            ],
            out_specs=pl.BlockSpec((pl.Squeezed(), total, tc), lambda i, j: (i, 0, j)),
        ),
        compiler_params=pltpu.CompilerParams(
            dimension_semantics=("parallel", "parallel"),
            vmem_limit_bytes=vmem_limit,
        ),
    )(x)

    # Wrapper glue on the tiny (N, total, C) output: per level, reorder to the
    # channel-major flattening of torch's y.view(n, c*level), then cat(dim=1).
    parts = []
    off = 0
    for lv in levels:
        blk = out[:, off:off + lv, :]                       # (N, lv, C)
        parts.append(jnp.transpose(blk, (0, 2, 1)).reshape(n, c * lv))
        off += lv
    return jnp.concatenate(parts, axis=1)


def _ref(x, levels, vertical):
    """Pure-JAX reference mirroring torch adaptive_max_pool2d + view/cat."""
    n, c, h, w = x.shape
    outs = []
    for lv in levels:
        if vertical:
            edges = _adaptive_bin_edges(h, lv)
            cols = [jnp.max(x[:, :, s:e, :], axis=(2, 3)) for (s, e) in edges]
        else:
            edges = _adaptive_bin_edges(w, lv)
            cols = [jnp.max(x[:, :, :, s:e], axis=(2, 3)) for (s, e) in edges]
        y = jnp.stack(cols, axis=-1)                        # (N, C, lv)
        outs.append(y.reshape(n, c * lv))
    return jnp.concatenate(outs, axis=1)


if __name__ == "__main__":
    key = jax.random.PRNGKey(0)
    k1, k2 = jax.random.split(key)

    # Case 1: horizontal, nested levels (hierarchical-combine path).
    x1 = jax.random.normal(k1, (2, 4, 12, 16), dtype=jnp.float32)
    levels1 = (1, 2, 4)
    y1 = jax.block_until_ready(temporal_pyramid_maxpool_2d(x1, levels1, vertical=False))
    assert y1.shape == (2, 4 * sum(levels1)), y1.shape
    assert jnp.allclose(y1, _ref(x1, levels1, False)), "horizontal mismatch"

    # Case 2: vertical (transpose-free path), non-nested levels (masked fallback).
    levels2 = (2, 3, 5)
    y2 = jax.block_until_ready(temporal_pyramid_maxpool_2d(x1, levels2, vertical=True))
    assert y2.shape == (2, 4 * sum(levels2)), y2.shape
    assert jnp.allclose(y2, _ref(x1, levels2, True)), "vertical mismatch"

    # Case 3: channel-tiled grid (forced TC=128 to exercise grid=(N, C//TC)).
    x3 = jax.random.normal(k2, (2, 256, 8, 16), dtype=jnp.float32)
    levels3 = (1, 2)
    y3 = jax.block_until_ready(
        temporal_pyramid_maxpool_2d(x3, levels3, vertical=False, channel_tile=128))
    assert y3.shape == (2, 256 * sum(levels3)), y3.shape
    assert jnp.allclose(y3, _ref(x3, levels3, False)), "channel-tiled mismatch"

    print("KERNEL_OK")
</pallas_src>

<mosaic_0001>
module attributes {stable_mosaic.version = 11 : i64} {
  func.func @kernel(%arg0: i32, %arg1: i32, %arg2: memref<1x4x12x16xf32, #tpu.memory_space<vmem>>, %arg3: memref<1x7x4xf32, #tpu.memory_space<vmem>>) attributes {dimension_semantics = [#tpu.dimension_semantics<parallel>, #tpu.dimension_semantics<parallel>], iteration_bounds = array<i64: 2, 1>, scalar_prefetch = 0 : i64, scratch_operands = 0 : i64, tpu.core_type = #tpu.core_type<tc>, window_params = [{transform_indices = @transform_0, window_bounds = array<i64: 1, 4, 12, 16>}, {transform_indices = @transform_1, window_bounds = array<i64: 1, 7, 4>}]} {
    %c0 = arith.constant 0 : index
    %c0_0 = arith.constant 0 : index
    %c0_1 = arith.constant 0 : index
    %c0_2 = arith.constant 0 : index
    %0 = vector.load %arg2[%c0, %c0_0, %c0_1, %c0_2] : memref<1x4x12x16xf32, #tpu.memory_space<vmem>>, vector<1x4x12x16xf32>
    %1 = vector.shape_cast %0 : vector<1x4x12x16xf32> to vector<4x12x16xf32>
    %cst = arith.constant dense<0xFF800000> : vector<4x16xf32>
    %2 = vector.multi_reduction <maximumf>, %1, %cst [1] : vector<4x12x16xf32> to vector<4x16xf32>
    %3 = tpu.iota {dimensions = array<i32: 1>} : vector<4x16xi32>
    %c0_i32 = arith.constant 0 : i32
    %4 = vector.broadcast %c0_i32 : i32 to vector<4x16xi32>
    %5 = arith.cmpi sge, %3, %4 : vector<4x16xi32>
    %c4_i32 = arith.constant 4 : i32
    %6 = vector.broadcast %c4_i32 : i32 to vector<4x16xi32>
    %7 = arith.cmpi slt, %3, %6 : vector<4x16xi32>
    %8 = arith.andi %5, %7 : vector<4x16xi1>
    %cst_3 = arith.constant 0xFF800000 : f32
    %9 = vector.broadcast %cst_3 : f32 to vector<4x16xf32>
    %10 = arith.select %8, %2, %9 : vector<4x16xi1>, vector<4x16xf32>
    %cst_4 = arith.constant dense<0xFF800000> : vector<4xf32>
    %11 = vector.multi_reduction <maximumf>, %10, %cst_4 [1] : vector<4x16xf32> to vector<4xf32>
    %12 = vector.shape_cast %11 : vector<4xf32> to vector<4x1xf32>
    %c4_i32_5 = arith.constant 4 : i32
    %13 = vector.broadcast %c4_i32_5 : i32 to vector<4x16xi32>
    %14 = arith.cmpi sge, %3, %13 : vector<4x16xi32>
    %c8_i32 = arith.constant 8 : i32
    %15 = vector.broadcast %c8_i32 : i32 to vector<4x16xi32>
    %16 = arith.cmpi slt, %3, %15 : vector<4x16xi32>
    %17 = arith.andi %14, %16 : vector<4x16xi1>
    %cst_6 = arith.constant 0xFF800000 : f32
    %18 = vector.broadcast %cst_6 : f32 to vector<4x16xf32>
    %19 = arith.select %17, %2, %18 : vector<4x16xi1>, vector<4x16xf32>
    %cst_7 = arith.constant dense<0xFF800000> : vector<4xf32>
    %20 = vector.multi_reduction <maximumf>, %19, %cst_7 [1] : vector<4x16xf32> to vector<4xf32>
    %21 = vector.shape_cast %20 : vector<4xf32> to vector<4x1xf32>
    %c8_i32_8 = arith.constant 8 : i32
    %22 = vector.broadcast %c8_i32_8 : i32 to vector<4x16xi32>
    %23 = arith.cmpi sge, %3, %22 : vector<4x16xi32>
    %c12_i32 = arith.constant 12 : i32
    %24 = vector.broadcast %c12_i32 : i32 to vector<4x16xi32>
    %25 = arith.cmpi slt, %3, %24 : vector<4x16xi32>
    %26 = arith.andi %23, %25 : vector<4x16xi1>
    %cst_9 = arith.constant 0xFF800000 : f32
    %27 = vector.broadcast %cst_9 : f32 to vector<4x16xf32>
    %28 = arith.select %26, %2, %27 : vector<4x16xi1>, vector<4x16xf32>
    %cst_10 = arith.constant dense<0xFF800000> : vector<4xf32>
    %29 = vector.multi_reduction <maximumf>, %28, %cst_10 [1] : vector<4x16xf32> to vector<4xf32>
    %30 = vector.shape_cast %29 : vector<4xf32> to vector<4x1xf32>
    %c12_i32_11 = arith.constant 12 : i32
    %31 = vector.broadcast %c12_i32_11 : i32 to vector<4x16xi32>
    %32 = arith.cmpi sge, %3, %31 : vector<4x16xi32>
    %c16_i32 = arith.constant 16 : i32
    %33 = vector.broadcast %c16_i32 : i32 to vector<4x16xi32>
    %34 = arith.cmpi slt, %3, %33 : vector<4x16xi32>
    %35 = arith.andi %32, %34 : vector<4x16xi1>
    %cst_12 = arith.constant 0xFF800000 : f32
    %36 = vector.broadcast %cst_12 : f32 to vector<4x16xf32>
    %37 = arith.select %35, %2, %36 : vector<4x16xi1>, vector<4x16xf32>
    %cst_13 = arith.constant dense<0xFF800000> : vector<4xf32>
    %38 = vector.multi_reduction <maximumf>, %37, %cst_13 [1] : vector<4x16xf32> to vector<4xf32>
    %39 = vector.shape_cast %38 : vector<4xf32> to vector<4x1xf32>
    %40 = arith.maximumf %12, %21 : vector<4x1xf32>
    %41 = arith.maximumf %40, %30 : vector<4x1xf32>
    %42 = arith.maximumf %41, %39 : vector<4x1xf32>
    %43 = arith.maximumf %12, %21 : vector<4x1xf32>
    %44 = arith.maximumf %30, %39 : vector<4x1xf32>
    %45 = tpu.concatenate %42, %43, %44, %12, %21, %30, %39 in 1 : vector<4x1xf32>, vector<4x1xf32>, vector<4x1xf32>, vector<4x1xf32>, vector<4x1xf32>, vector<4x1xf32>, vector<4x1xf32> -> vector<4x7xf32>
    %46 = tpu.transpose %45, [1, 0] : vector<4x7xf32> -> vector<7x4xf32>
    %c0_14 = arith.constant 0 : index
    %c0_15 = arith.constant 0 : index
    %c0_16 = arith.constant 0 : index
    %47 = vector.load %arg3[%c0_14, %c0_15, %c0_16] : memref<1x7x4xf32, #tpu.memory_space<vmem>>, vector<1x7x4xf32>
    %48 = vector.shape_cast %47 : vector<1x7x4xf32> to vector<7x4xf32>
    %49 = vector.shape_cast %46 : vector<7x4xf32> to vector<1x7x4xf32>
    tpu.vector_store %arg3[%c0_14, %c0_15, %c0_16], %49 {strides = array<i32>} : memref<1x7x4xf32, #tpu.memory_space<vmem>>, vector<1x7x4xf32>,
    return
  }
  func.func @transform_0(%arg0: i32, %arg1: i32) -> (i32, i32, i32, i32) {
    %c0_i32 = arith.constant 0 : i32
    %c0_i32_0 = arith.constant 0 : i32
    %c0_i32_1 = arith.constant 0 : i32
    return %arg0, %arg1, %c0_i32, %c0_i32_0 : i32, i32, i32, i32
  }
  func.func @transform_1(%arg0: i32, %arg1: i32) -> (i32, i32, i32) {
    %c0_i32 = arith.constant 0 : i32
    %c0_i32_0 = arith.constant 0 : i32
    return %arg0, %c0_i32, %arg1 : i32, i32, i32
  }
}

</mosaic_0001>

<llo_original>
// kernel: tpu_custom_call.1
$region0: #{tpu_custom_call.1}
  #allocation0 [shape = 'u32[]', space=smem, size = 0x4, offset = 0x4, fixed_abs, tag = 'smem constant byte address 0x4 - core index']
  #allocation1 [shape = 'u32[144,128]{1,0:T(1,128)}', space=vmem, size = 0x12000, scoped, tag = 'internal scratch']
  %s0 = inlined_call_operand.vmem [shape: f32[2,4,12,16], index: 0, kind: input, shape index: {}]
  %s1 = inlined_call_operand.vmem [shape: f32[2,7,4], index: 1, kind: output, shape index: {}]
  %s2 = sld [smem:[#allocation0]]
  $region37: #{tpu_custom_call.1} parent=0
    _
  %s4 = ssub.s32 1, %s2
  %s5 = scalar_select 0, %s4, %s2
  loop: start=0, step=1, limit=4
  $region2: #{tpu_custom_call.1} parent=0 // loop_pre_header
    _
  $region3: #{tpu_custom_call.1} parent=0 // loop_header
    %s7 = sphi 0, %s11
    %p8 = scmp.ge.s32.totalorder %s7, 4
    %s14 = sphi 0, %s26
    %s15 = sphi 0, %s22
    %s16 = sphi 0, %s14
    %s17 = sphi 0, %s15
    %s18 = sphi 0, %s16
    %s19 = sphi 0, %s17
    %s31 = sphi 0, %s33
    %s34 = sphi 0, %s31
    %s35 = sphi 0, %s34
    %s51 = sphi 0, %s35
    %s59 = sphi 0, %s61
    %s62 = sphi 0, %s59
    %s63 = sphi 0, %s62
    %s79 = sphi 0, %s63
  $region4: #{tpu_custom_call.1} parent=0 // loop_header_branch
    %10 = sbr.rel (%p8) target = $region8
  $region5: #{tpu_custom_call.1} parent=0 // loop_body
    %s12 = ssub.s32 %s7, 1
    %s13 = ssub.s32 %s7, 2
    %s20 = sadd.s32 1, %s15
    %p21 = scmp.ge.s32.totalorder %s20, 1
    %s22 = scalar_select %p21, 0, %s20
    %s23 = sadd.s32 1, %s14
    %s24 = scalar_select %p21, %s23, %s14
    %p25 = scmp.ge.s32.totalorder %s24, 2
    %s26 = scalar_select %p25, 0, %s24
    %s27 = ssub.s32 %s14, %s26
    %s28 = ssub.s32 %s15, %s22
    %s29 = sor.u32 %s27, %s28
    %p30 = scmp.eq.s32.totalorder %s29, 0
    %s32 = sadd.s32 %s31, 1
    %s33 = scalar_select %p30, %s31, %s32
    %p36 = pneg %p30
    %p37 = scmp.eq.s32.totalorder %s7, 1
    %p38 = por %p36, %p37
    %p39 = scmp.ne.s32.totalorder %s31, %s34
    %p40 = scmp.eq.s32.totalorder %s7, 0
    %p41 = por %p39, %p40
    %p42 = scmp.ne.s32.totalorder %s31, %s34
    %p43 = scmp.eq.s32.totalorder %s12, 1
    %p44 = por %p42, %p43
    %p45 = scmp.ne.s32.totalorder %s34, %s35
    %p46 = scmp.eq.s32.totalorder %s12, 0
    %p47 = por %p45, %p46
    %p48 = scmp.ne.s32.totalorder %s34, %s35
    %p49 = scmp.eq.s32.totalorder %s13, 1
    %p50 = por %p48, %p49
    %p52 = scmp.ne.s32.totalorder %s35, %s51
    %p53 = scmp.eq.s32.totalorder %s13, 0
    %p54 = por %p52, %p53
    %s55 = ssub.s32 %s14, %s26
    %s56 = ssub.s32 %s15, %s22
    %s57 = sor.u32 %s55, %s56
    %p58 = scmp.eq.s32.totalorder %s57, 0
    %s60 = sadd.s32 %s59, 1
    %s61 = scalar_select %p58, %s59, %s60
    %p64 = pneg %p58
    %p65 = scmp.eq.s32.totalorder %s7, 1
    %p66 = por %p64, %p65
    %p67 = scmp.ne.s32.totalorder %s59, %s62
    %p68 = scmp.eq.s32.totalorder %s7, 0
    %p69 = por %p67, %p68
    %p70 = scmp.ne.s32.totalorder %s59, %s62
    %p71 = scmp.eq.s32.totalorder %s12, 1
    %p72 = por %p70, %p71
    %p73 = scmp.ne.s32.totalorder %s62, %s63
    %p74 = scmp.eq.s32.totalorder %s12, 0
    %p75 = por %p73, %p74
    %p76 = scmp.ne.s32.totalorder %s62, %s63
    %p77 = scmp.eq.s32.totalorder %s13, 1
    %p78 = por %p76, %p77
    %p80 = scmp.ne.s32.totalorder %s63, %s79
    %p81 = scmp.eq.s32.totalorder %s13, 0
    %p82 = por %p80, %p81
    %p83 = scmp.le.s32.totalorder 1, %s7
    %p84 = scmp.lt.s32.totalorder %s7, 3
    %p85 = pnand %p83, %p84
    %p86 = pneg %p85
    // Predicated region
    $region9: #{tpu_custom_call.1} parent=5 // pred_check
      _
    $region10: #{tpu_custom_call.1} parent=5 // pred_check_branch
      %88 = sbr.rel (%p85) target = $region12
    $region11: #{tpu_custom_call.1} parent=5 // pred_region
      %s89 = ssub.s32 %s7, 1
    $region12: #{tpu_custom_call.1} parent=5 // pred_fallthru
      _
    %p90 = scmp.lt.s32.totalorder %s7, 2
    // Predicated region
    $region13: #{tpu_custom_call.1} parent=5 // pred_check
      %p91 = pneg %p90
    $region14: #{tpu_custom_call.1} parent=5 // pred_check_branch
      %93 = sbr.rel (%p91) target = $region16
    $region15: #{tpu_custom_call.1} parent=5 // pred_region
      // Predicated region
      $region17: #{tpu_custom_call.1} parent=15 // pred_check
        %p94 = pneg %p41
      $region18: #{tpu_custom_call.1} parent=15 // pred_check_branch
        %96 = sbr.rel (%p94) target = $region20
      $region19: #{tpu_custom_call.1} parent=15 // pred_region
        %s97 = smul.u32 4, %s15
        %p98 = scmp.lt.s32.totalorder %s14, 1
        %s99 = scalar_select %p98, %s14, 1
        %p100 = scmp.lt.s32.totalorder %s97, 3
        %s101 = scalar_select %p100, %s97, 3
        %s102 = smul.addr %s101, 2
        %s103 = smul.addr %s99, 8
        %s104 = sadd.s32 %s102, %s103
        %s105 = smul.addr %s104, 8
        %s106 = scalar_lea.vmem %s0, %s105
        %s107 = smul.u32 4, %s15
      $region20: #{tpu_custom_call.1} parent=15 // pred_fallthru
        _
    $region16: #{tpu_custom_call.1} parent=5 // pred_fallthru
      _
    %p108 = scmp.le.s32.totalorder 1, %s7
    %p109 = scmp.lt.s32.totalorder %s7, 3
    %p110 = pnand %p108, %p109
    %p111 = pneg %p110
    // Predicated region
    $region21: #{tpu_custom_call.1} parent=5 // pred_check
      _
    $region22: #{tpu_custom_call.1} parent=5 // pred_check_branch
      %113 = sbr.rel (%p110) target = $region24
    $region23: #{tpu_custom_call.1} parent=5 // pred_region
      %s114 = ssub.s32 %s7, 1
      %s115 = smul.u32 4, %s17
      %p116 = scmp.lt.s32.totalorder %s16, 1
      %s117 = scalar_select %p116, %s16, 1
      %p118 = scmp.lt.s32.totalorder %s115, 3
      %s119 = scalar_select %p118, %s115, 3
      %s120 = smul.addr %s119, 2
      %s121 = smul.addr %s117, 8
      %s122 = sadd.s32 %s120, %s121
      %s123 = smul.addr %s122, 8
      %s124 = scalar_lea.vmem %s0, %s123
      %p125 = pneg %p47
      %p126 = pneg %p44
      %p127 = pneg %p75
      %p128 = pneg %p72
      %p129 = scmp.lt.s32.totalorder %s16, 1
      %s130 = scalar_select %p129, %s16, 1
      %p131 = scmp.lt.s32.totalorder %s17, 0
      %s132 = scalar_select %p131, %s17, 0
      %s133 = sadd.s32 %s132, %s130
      %s134 = smul.addr %s133, 8
      %s135 = scalar_lea.vmem %s1, %s134
      %s136 = smul.u32 4, %s17
      %p137 = scmp.lt.s32.totalorder %s16, 1
      %s138 = scalar_select %p137, %s16, 1
      %p139 = scmp.lt.s32.totalorder %s136, 3
      %s140 = scalar_select %p139, %s136, 3
      %s141 = smul.addr %s140, 2
      %s142 = smul.addr %s138, 8
      %s143 = sadd.s32 %s141, %s142
      %s144 = smul.addr %s143, 8
      %s145 = scalar_lea.vmem %s0, %s144
      %s146 = smul.u32 4, %s17
      %p147 = scmp.lt.s32.totalorder %s16, 1
      %s148 = scalar_select %p147, %s16, 1
      %p149 = scmp.lt.s32.totalorder %s17, 0
      %s150 = scalar_select %p149, %s17, 0
      %s151 = sadd.s32 %s150, %s148
      %s152 = smul.addr %s151, 8
      %s153 = scalar_lea.vmem %s1, %s152
      %v154 = vld [vmem:[%s145] sm:$0xff]
      %v155 = vld [vmem:[%s145 + $0x8] sm:$0xf]
      %v156 = vld [vmem:[%s145 + $0x10] sm:$0xff]
      %v157 = vld [vmem:[%s145 + $0x18] sm:$0xf]
      %v158 = vld [vmem:[%s145 + $0x20] sm:$0xff]
      %v159 = vld [vmem:[%s145 + $0x28] sm:$0xf]
      %v160 = vld [vmem:[%s145 + $0x30] sm:$0xff]
      %v161 = vld [vmem:[%s145 + $0x38] sm:$0xf]
      %vm162 = vcmask 130048
      %v163 = vsel %vm162, %v154, -inf
      %vm164 = vcmask 125952
      %v165 = vsel %vm164, %v155, -inf
      %v166 = vmax.f32 %v163, %v165
      %v167 = vrot.slane %v166, 4
      %v168 = vmax.f32 %v166, %v167
      %v169 = vrot.slane %v168, 2
      %v170 = vmax.f32 %v168, %v169
      %v171 = vrot.slane %v170, 1
      %v172 = vmax.f32 %v170, %v171
      %v173 = vsel %vm162, %v156, -inf
      %v174 = vsel %vm164, %v157, -inf
      %v175 = vmax.f32 %v173, %v174
      %v176 = vrot.slane %v175, 4
      %v177 = vmax.f32 %v175, %v176
      %v178 = vrot.slane %v177, 2
      %v179 = vmax.f32 %v177, %v178
      %v180 = vrot.slane %v179, 1
      %v181 = vmax.f32 %v179, %v180
      %v182 = vsel %vm162, %v158, -inf
      %v183 = vsel %vm164, %v159, -inf
      %v184 = vmax.f32 %v182, %v183
      %v185 = vrot.slane %v184, 4
      %v186 = vmax.f32 %v184, %v185
      %v187 = vrot.slane %v186, 2
      %v188 = vmax.f32 %v186, %v187
      %v189 = vrot.slane %v188, 1
      %v190 = vmax.f32 %v188, %v189
      %v191 = vsel %vm162, %v160, -inf
      %v192 = vsel %vm164, %v161, -inf
      %v193 = vmax.f32 %v191, %v192
      %v194 = vrot.slane %v193, 4
      %v195 = vmax.f32 %v193, %v194
      %v196 = vrot.slane %v195, 2
      %v197 = vmax.f32 %v195, %v196
      %v198 = vrot.slane %v197, 1
      %v199 = vmax.f32 %v197, %v198
      %v200 = vlaneseq
      %v201 = vand.u32 %v200, 127
      %vm202 = vcmp.ge.s32.totalorder %v201, 0
      %vm203 = vcmp.lt.s32.totalorder %v201, 4
      %vm204 = vmand %vm202, %vm203
      %vm209 = vcmask 1041409
      %v210 = vsel %vm209, %v181, %v172
      %vm211 = vcmask 1042434
      %v212 = vsel %vm211, %v190, %v210
      %vm213 = vcmask 1043459
      %v214 = vsel %vm213, %v199, %v212
      %v216 = vsel %vm204, %v214, -inf
      %v217 = vsel %vm164, %v216, -inf
      %218 = vmax.xlane.f32.xlu0 %v217
      %v219 = vpop.xlane.xlu0 %218
      %vm220 = vcmp.ge.s32.totalorder %v201, 4
      %vm221 = vcmp.lt.s32.totalorder %v201, 8
      %vm222 = vmand %vm220, %vm221
      %v223 = vsel %vm222, %v214, -inf
      %v224 = vsel %vm164, %v223, -inf
      %225 = vmax.xlane.f32.xlu0 %v224
      %v226 = vpop.xlane.xlu0 %225
      %vm227 = vcmp.ge.s32.totalorder %v201, 8
      %vm228 = vcmp.lt.s32.totalorder %v201, 12
      %vm229 = vmand %vm227, %vm228
      %v230 = vsel %vm229, %v214, -inf
      %v231 = vsel %vm164, %v230, -inf
      %232 = vmax.xlane.f32.xlu0 %v231
      %v233 = vpop.xlane.xlu0 %232
      %vm234 = vcmp.ge.s32.totalorder %v201, 12
      %vm235 = vcmp.lt.s32.totalorder %v201, 16
      %vm236 = vmand %vm234, %vm235
      %v237 = vsel %vm236, %v214, -inf
      %v238 = vsel %vm164, %v237, -inf
      %239 = vmax.xlane.f32.xlu0 %v238
      %v240 = vpop.xlane.xlu0 %239
      %v241 = vmax.f32 %v219, %v226
      %v242 = vmax.f32 %v241, %v233
      %v243 = vmax.f32 %v242, %v240
      %v244 = vmax.f32 %v233, %v240
      %vm245 = vcmask 7168
      %v246 = vsel %vm245, %v243, %v241
      %vm247 = vcmask 15360
      %v248 = vsel %vm247, %v246, %v244
      %vm249 = vcmask 23552
      %v250 = vsel %vm249, %v248, %v219
      %vm251 = vcmask 31744
      %v252 = vsel %vm251, %v250, %v226
      %vm253 = vcmask 39936
      %v254 = vsel %vm253, %v252, %v233
      %vm255 = vcmask 48128
      %v256 = vsel %vm255, %v254, %v240
      %257 = vxpose.xlu0.b32.start [1/16] %v256, 128
      %258 = vxpose.xlu0.b32.cont [2/16] 0.0, 128
      %259 = vxpose.xlu0.b32.cont [3/16] 0.0, 128
      %260 = vxpose.xlu0.b32.cont [4/16] 0.0, 128
      %261 = vxpose.xlu0.b32.cont [5/16] 0.0, 128
      %262 = vxpose.xlu0.b32.cont [6/16] 0.0, 128
      %263 = vxpose.xlu0.b32.cont [7/16] 0.0, 128
      %264 = vxpose.xlu0.b32.cont [8/16] 0.0, 128
      %265 = vxpose.xlu0.b32.cont [9/16] 0.0, 128
      %266 = vxpose.xlu0.b32.cont [10/16] 0.0, 128
      %267 = vxpose.xlu0.b32.cont [11/16] 0.0, 128
      %268 = vxpose.xlu0.b32.cont [12/16] 0.0, 128
      %269 = vxpose.xlu0.b32.cont [13/16] 0.0, 128
      %270 = vxpose.xlu0.b32.cont [14/16] 0.0, 128
      %271 = vxpose.xlu0.b32.cont [15/16] 0.0, 128
      %272 = vxpose.xlu0.b32.end [16/16] 0.0, 128
      %v273 = vpop.trf.xlu0
      %v274 = vpop.trf.xlu0
      %v275 = vpop.trf.xlu0
      %v276 = vpop.trf.xlu0
      %v277 = vpop.trf.xlu0
      %v278 = vpop.trf.xlu0
      %v279 = vpop.trf.xlu0
      %v280 = vpop.trf.xlu0
      %v281 = vpop.trf.xlu0
      %v282 = vpop.trf.xlu0
      %v283 = vpop.trf.xlu0
      %v284 = vpop.trf.xlu0
      %v285 = vpop.trf.xlu0
      %v286 = vpop.trf.xlu0
      %v287 = vpop.trf.xlu0
      %v288 = vpop.trf.xlu0
      %vm289 = vcmask 30720
      %290 = vst.msk [vmem:[%s153] sm:$0x7f] %vm289, %v273
      %p291 = scmp.lt.s32.totalorder %s16, 1
      %s292 = scalar_select %p291, %s16, 1
      %p293 = scmp.lt.s32.totalorder %s17, 0
      %s294 = scalar_select %p293, %s17, 0
      %s295 = sadd.s32 %s294, %s292
      %s296 = smul.addr %s295, 8
      %s297 = scalar_lea.vmem %s1, %s296
      // Predicated region
      $region25: #{tpu_custom_call.1} parent=23 // pred_check
        %p298 = pneg %p72
      $region26: #{tpu_custom_call.1} parent=23 // pred_check_branch
        %300 = sbr.rel (%p298) target = $region28
      $region27: #{tpu_custom_call.1} parent=23 // pred_region
        _
      $region28: #{tpu_custom_call.1} parent=23 // pred_fallthru
        _
    $region24: #{tpu_custom_call.1} parent=5 // pred_fallthru
      _
    %p301 = scmp.le.s32.totalorder 2, %s7
    // Predicated region
    $region29: #{tpu_custom_call.1} parent=5 // pred_check
      %p302 = pneg %p301
    $region30: #{tpu_custom_call.1} parent=5 // pred_check_branch
      %304 = sbr.rel (%p302) target = $region32
    $region31: #{tpu_custom_call.1} parent=5 // pred_region
      %s305 = ssub.s32 %s7, 2
      // Predicated region
      $region33: #{tpu_custom_call.1} parent=31 // pred_check
        %p306 = pneg %p78
      $region34: #{tpu_custom_call.1} parent=31 // pred_check_branch
        %308 = sbr.rel (%p306) target = $region36
      $region35: #{tpu_custom_call.1} parent=31 // pred_region
        %p309 = scmp.lt.s32.totalorder %s18, 1
        %s310 = scalar_select %p309, %s18, 1
        %p311 = scmp.lt.s32.totalorder %s19, 0
        %s312 = scalar_select %p311, %s19, 0
        %s313 = sadd.s32 %s312, %s310
        %s314 = smul.addr %s313, 8
        %s315 = scalar_lea.vmem %s1, %s314
      $region36: #{tpu_custom_call.1} parent=31 // pred_fallthru
        _
    $region32: #{tpu_custom_call.1} parent=5 // pred_fallthru
      _
  $region6: #{tpu_custom_call.1} parent=0 // loop_footer
    %s11 = sadd.s32 1, %s7
  $region7: #{tpu_custom_call.1} parent=0 // loop_footer_branch
    %6 = sbr.rel target = $region3
  $region8: #{tpu_custom_call.1} parent=0 // loop_exit
    _

</llo_original>
